<compile_context>
chip_gen: v6e
topology: v6e:2x2x1
jax: 0.10.0
libtpu: 0.0.40
codegen_flags: <defaults>
</compile_context>

<pallas_src>
import functools

import jax
import jax.numpy as jnp
from jax.experimental import pallas as pl
from jax.experimental.pallas import tpu as pltpu


def _cdiv(a, b):
    return -(-a // b)


def _vmem_capacity_bytes():
    try:
        return int(pltpu.get_tpu_info().vmem_capacity_bytes)
    except Exception:
        return 64 << 20          # conservative (v7x-sized) fallback


# ----------------------------------------------------------------------------
# Param packing (Path A only): one (Cr + C + 2, max(C, Cr)) f32 operand.
#   rows [0, Cr)      : w1 (Cr, C) at [:, :C]
#   rows [Cr, Cr + C) : w2 (C, Cr) at [:, :Cr]
#   row  Cr + C       : b1 at [:Cr]
#   row  Cr + C + 1   : b2 at [:C]
# ----------------------------------------------------------------------------
def _pack_params(w1, b1, w2, b2):
    Cr, C = w1.shape
    K = max(C, Cr)
    R = Cr + C + 2
    p = jnp.zeros((R, K), jnp.float32)
    p = p.at[:Cr, :C].set(jnp.asarray(w1, jnp.float32))
    p = p.at[Cr:Cr + C, :Cr].set(jnp.asarray(w2, jnp.float32))
    p = p.at[Cr + C, :Cr].set(jnp.asarray(b1, jnp.float32))
    p = p.at[Cr + C + 1, :C].set(jnp.asarray(b2, jnp.float32))
    return p, R, K


# ----------------------------------------------------------------------------
# Path A: fused single-pass kernel, TN batches per grid step.
# ----------------------------------------------------------------------------
def _ca_fused_kernel(x_ref, p_ref, o_ref, *, c, cr, inv_s):
    x = x_ref[...]                                  # (TN, C, S) input dtype
    p = p_ref[...]                                  # packed params, f32
    w1 = p[:cr, :c]                                 # (Cr, C)
    w2 = p[cr:cr + c, :cr]                          # (C, Cr)
    b1 = p[cr + c:cr + c + 1, :cr]                  # (1, Cr)
    b2 = p[cr + c + 1:cr + c + 2, :c]               # (1, C)

    # global average pool: f32 accumulation only (no f32 copy of x)
    y = jnp.sum(x, axis=-1, dtype=jnp.float32) * inv_s           # (TN, C)

    # conv1 (C -> Cr) + ReLU: contraction over C sits on the lane axis
    y1 = jnp.sum(y[:, None, :] * w1[None, :, :], axis=-1) + b1   # (TN, Cr)
    y1 = jnp.maximum(y1, 0.0)
    # conv2 (Cr -> C) + sigmoid: contraction over Cr on the lane axis
    y2 = jnp.sum(y1[:, None, :] * w2[None, :, :], axis=-1) + b2  # (TN, C)
    scale = jax.nn.sigmoid(y2)                                    # (TN, C)

    # rescale in the INPUT dtype (downcast scale instead of upcasting x)
    o_ref[...] = x * scale[:, :, None].astype(x.dtype)


# ----------------------------------------------------------------------------
# Path B, pass 1: spatially tiled pool -> f32 partial sums (N, n_par, C, 1).
# Grid (N, n_par, ns_in); last axis is the "arbitrary" reduction axis.
# Only the tail block pays the out-of-range mask (under pl.when).
# ----------------------------------------------------------------------------
def _pool_partial_kernel(x_ref, part_ref, acc_ref, *, ts, s_total, ns_in, emit_mask):
    s_idx = pl.program_id(2)

    @pl.when(s_idx == 0)
    def _():
        acc_ref[...] = jnp.zeros_like(acc_ref)

    x = x_ref[0]                                                 # (C, TS)

    def _accum(xv):
        acc_ref[...] += jnp.sum(xv, axis=-1, keepdims=True, dtype=jnp.float32)

    if emit_mask:
        blk = pl.program_id(1) * ns_in + s_idx                   # global S-block idx
        needs_mask = (blk + 1) * ts > s_total

        @pl.when(needs_mask)
        def _():
            lane = jax.lax.broadcasted_iota(jnp.int32, x.shape, 1) + blk * ts
            _accum(jnp.where(lane < s_total, x, jnp.zeros_like(x)))

        @pl.when(jnp.logical_not(needs_mask))
        def _():
            _accum(x)
    else:
        _accum(x)

    @pl.when(s_idx == pl.num_programs(2) - 1)
    def _():
        part_ref[0, 0] = acc_ref[...]                            # (C, 1)


# ----------------------------------------------------------------------------
# Path B, pass 2: rescale, embarrassingly parallel over (N, S tiles).
# Ragged last S tile relies on Pallas padded reads / dropped OOB writes.
# ----------------------------------------------------------------------------
def _rescale_kernel(x_ref, scale_ref, o_ref):
    x = x_ref[0]                                                 # (C, TS)
    s = scale_ref[0]                                             # (C, 1) f32
    o_ref[0] = x * s.astype(x.dtype)


# ----------------------------------------------------------------------------
# Wrapper
# ----------------------------------------------------------------------------
def ca_layer(x, w1, b1, w2, b2, *,
             target_block_bytes=None,     # Path A tile target (default ~8 MiB)
             min_block_bytes=512 << 10,   # don't shrink tiles below this for step count
             max_slab_bytes=None,         # Path A per-batch (C,S) ceiling (VMEM-derived)
             spatial_tile_bytes=None,     # Path B S-tile budget (default ~4 MiB)
             vmem_limit_bytes=None):
    """x: (N, C, D, H, W); w1: (Cr, C); b1: (Cr,); w2: (C, Cr); b2: (C,)."""
    N, C, D, H, W = x.shape
    Cr = w1.shape[0]
    S = D * H * W
    itemsize = jnp.dtype(x.dtype).itemsize

    # ---- generation-aware budgets -------------------------------------------
    vmem_cap = _vmem_capacity_bytes()
    if vmem_limit_bytes is None:
        vmem_limit_bytes = min(int(vmem_cap * 0.65), 100 << 20)  # ~83 MiB v5e/v6e, ~41 MiB v7x
    # in + out, double-buffered => ~4x the tile must fit under the limit
    tile_budget = max(1 << 20, (vmem_limit_bytes - (4 << 20)) // 4)
    target_block_bytes = min(target_block_bytes or (8 << 20), tile_budget)
    spatial_tile_bytes = min(spatial_tile_bytes or (4 << 20), tile_budget)
    if max_slab_bytes is None:
        max_slab_bytes = tile_budget
    # aim for >= min_steps grid steps so each TensorCore keeps DMA/compute overlap
    min_steps = 8 if vmem_cap <= (96 << 20) else 4                # v7x has 2 TCs

    x_flat = x.reshape(N, C, S)
    slab_bytes = C * S * itemsize

    if slab_bytes <= max_slab_bytes:
        # ---------------- Path A: fused, batch-packed single pass -----------
        params, R, K = _pack_params(w1, b1, w2, b2)
        tn = int(max(1, min(N, target_block_bytes // max(1, slab_bytes))))
        if _cdiv(N, tn) < min_steps:
            tn_cap = max(1, N // min_steps)
            if tn_cap * slab_bytes >= min_block_bytes:
                tn = min(tn, tn_cap)
        grid0 = _cdiv(N, tn)   # ragged last block: padded reads, OOB writes dropped

        kernel = functools.partial(_ca_fused_kernel, c=C, cr=Cr, inv_s=1.0 / S)
        out = pl.pallas_call(
            kernel,
            out_shape=jax.ShapeDtypeStruct((N, C, S), x.dtype),
            grid_spec=pltpu.PrefetchScalarGridSpec(
                num_scalar_prefetch=0,
                grid=(grid0,),
                in_specs=[
                    pl.BlockSpec((tn, C, S), lambda i: (i, 0, 0)),
                    pl.BlockSpec((R, K), lambda i: (0, 0)),
                ],
                out_specs=pl.BlockSpec((tn, C, S), lambda i: (i, 0, 0)),
            ),
            compiler_params=pltpu.CompilerParams(
                dimension_semantics=("parallel",),
                vmem_limit_bytes=vmem_limit_bytes),
        )(x_flat, params)
        return out.reshape(N, C, D, H, W)

    # ---------------- Path B: two-pass, spatially tiled ----------------------
    # TS: multiple of 128 close to spatial_tile_bytes; only accept an exact
    # divisor of S if it is >= half the cap, otherwise use the cap + masking.
    row_bytes = max(1, C * itemsize)
    ts_cap = max(128, (spatial_tile_bytes // row_bytes) // 128 * 128)
    if S <= ts_cap:
        ts = S                       # single full-extent block (always legal)
    else:
        ts = 0
        lo = max(ts_cap // 2, 128)
        for cand in range(ts_cap, lo - 1, -128):
            if S % cand == 0:
                ts = cand
                break
        if ts == 0:
            ts = ts_cap
    n_s = _cdiv(S, ts)

    # split the S axis n_par ways so small N still fills both TCs on v7x
    want_units = 4
    n_par = min(_cdiv(want_units, N), n_s) if N < want_units else 1
    ns_in = _cdiv(n_s, n_par)
    emit_mask = (S % ts != 0) or (n_par * ns_in != n_s)

    p1 = functools.partial(_pool_partial_kernel, ts=ts, s_total=S,
                           ns_in=ns_in, emit_mask=emit_mask)
    partial = pl.pallas_call(
        p1,
        out_shape=jax.ShapeDtypeStruct((N, n_par, C, 1), jnp.float32),
        grid_spec=pltpu.PrefetchScalarGridSpec(
            num_scalar_prefetch=0,
            grid=(N, n_par, ns_in),
            in_specs=[
                pl.BlockSpec((1, C, ts), lambda n, p, s: (n, 0, p * ns_in + s)),
            ],
            out_specs=pl.BlockSpec((1, 1, C, 1), lambda n, p, s: (n, p, 0, 0)),
            scratch_shapes=[pltpu.VMEM((C, 1), jnp.float32)],
        ),
        compiler_params=pltpu.CompilerParams(
            dimension_semantics=("parallel", "parallel", "arbitrary"),
            vmem_limit_bytes=vmem_limit_bytes),
    )(x_flat)

    # tiny MLP + sigmoid on the (N, C) pooled means: negligible plain-XLA op
    y = jnp.sum(partial, axis=(1, 3)) * jnp.float32(1.0 / S)          # (N, C)
    w1f, b1f = jnp.asarray(w1, jnp.float32), jnp.asarray(b1, jnp.float32)
    w2f, b2f = jnp.asarray(w2, jnp.float32), jnp.asarray(b2, jnp.float32)
    y1 = jnp.maximum(y @ w1f.T + b1f[None, :], 0.0)
    scale = jax.nn.sigmoid(y1 @ w2f.T + b2f[None, :])[:, :, None]     # (N, C, 1)

    out = pl.pallas_call(
        _rescale_kernel,
        out_shape=jax.ShapeDtypeStruct((N, C, S), x.dtype),
        grid_spec=pltpu.PrefetchScalarGridSpec(
            num_scalar_prefetch=0,
            grid=(N, n_s),
            in_specs=[
                pl.BlockSpec((1, C, ts), lambda n, s: (n, 0, s)),
                pl.BlockSpec((1, C, 1), lambda n, s: (n, 0, 0)),
            ],
            out_specs=pl.BlockSpec((1, C, ts), lambda n, s: (n, 0, s)),
        ),
        compiler_params=pltpu.CompilerParams(
            dimension_semantics=("parallel", "parallel"),
            vmem_limit_bytes=vmem_limit_bytes),
    )(x_flat, scale)
    return out.reshape(N, C, D, H, W)


def ca_layer_ref(x, w1, b1, w2, b2):
    """Pure-JAX reference matching the PyTorch forward."""
    y = jnp.mean(x, axis=(2, 3, 4))                                    # (N, C)
    y1 = jax.nn.relu(y @ w1.T + b1[None, :])                           # (N, Cr)
    y2 = jax.nn.sigmoid(y1 @ w2.T + b2[None, :])                       # (N, C)
    return x * y2[:, :, None, None, None]


if __name__ == "__main__":
    # Shapes consistent with the module: channel=32, reduction=16.
    N, C = 2, 32
    reduction = 16
    Cr = C // reduction
    D, H, W = 4, 8, 8
    S = D * H * W

    key = jax.random.PRNGKey(0)
    kx, k1, k2, k3, k4, kx2, kx3 = jax.random.split(key, 7)

    x = jax.random.normal(kx, (N, C, D, H, W), dtype=jnp.float32)
    # Conv3d(C, Cr, 1) weight (Cr, C, 1, 1, 1) -> (Cr, C); bias (Cr,)
    w1 = 0.1 * jax.random.normal(k1, (Cr, C), dtype=jnp.float32)
    b1 = 0.1 * jax.random.normal(k2, (Cr,), dtype=jnp.float32)
    # Conv3d(Cr, C, 1) weight (C, Cr, 1, 1, 1) -> (C, Cr); bias (C,)
    w2 = 0.1 * jax.random.normal(k3, (C, Cr), dtype=jnp.float32)
    b2 = 0.1 * jax.random.normal(k4, (C,), dtype=jnp.float32)

    ref = ca_layer_ref(x, w1, b1, w2, b2)

    # 1) auto-dispatched path (fused single pass, batch-packed blocks)
    out = jax.block_until_ready(ca_layer(x, w1, b1, w2, b2))
    assert out.shape == x.shape
    assert jnp.allclose(out, ref, atol=1e-5, rtol=1e-5), "fused path mismatch"

    # 2) force the two-pass spatially tiled path (large-volume / VMEM-safe path)
    out2 = jax.block_until_ready(
        ca_layer(x, w1, b1, w2, b2,
                 max_slab_bytes=0, spatial_tile_bytes=C * 4 * 128))
    assert jnp.allclose(out2, ref, atol=1e-5, rtol=1e-5), "two-pass mismatch"

    # 3) two-pass path with S not a multiple of 128 (exercises tail masking)
    x3 = jax.random.normal(kx2, (N, C, 3, 8, 8), dtype=jnp.float32)   # S = 192
    ref3 = ca_layer_ref(x3, w1, b1, w2, b2)
    out3 = jax.block_until_ready(
        ca_layer(x3, w1, b1, w2, b2,
                 max_slab_bytes=0, spatial_tile_bytes=C * 4 * 128))
    assert jnp.allclose(out3, ref3, atol=1e-5, rtol=1e-5), "masked two-pass mismatch"

    # 4) fused path with a ragged batch block (N not divisible by tn)
    x4 = jax.random.normal(kx3, (3, C, D, H, W), dtype=jnp.float32)
    ref4 = ca_layer_ref(x4, w1, b1, w2, b2)
    out4 = jax.block_until_ready(
        ca_layer(x4, w1, b1, w2, b2, target_block_bytes=2 * C * S * 4))
    assert jnp.allclose(out4, ref4, atol=1e-5, rtol=1e-5), "ragged fused mismatch"

    print("KERNEL_OK")
</pallas_src>

<mosaic_0001>
module attributes {stable_mosaic.version = 11 : i64} {
  func.func @_ca_fused_kernel(%arg0: i32, %arg1: memref<2x32x256xf32, #tpu.memory_space<vmem>>, %arg2: memref<36x32xf32, #tpu.memory_space<vmem>>, %arg3: memref<2x32x256xf32, #tpu.memory_space<vmem>>) attributes {dimension_semantics = [#tpu.dimension_semantics<parallel>], iteration_bounds = array<i64: 1>, scalar_prefetch = 0 : i64, scratch_operands = 0 : i64, tpu.core_type = #tpu.core_type<tc>, window_params = [{transform_indices = @transform_0, window_bounds = array<i64: 2, 32, 256>}, {pipeline_mode = #tpu.pipeline_mode<synchronous>, transform_indices = @transform_1, window_bounds = array<i64: 36, 32>}, {transform_indices = @transform_2, window_bounds = array<i64: 2, 32, 256>}]} {
    %c0 = arith.constant 0 : index
    %c0_0 = arith.constant 0 : index
    %c0_1 = arith.constant 0 : index
    %0 = vector.load %arg1[%c0, %c0_0, %c0_1] : memref<2x32x256xf32, #tpu.memory_space<vmem>>, vector<2x32x256xf32>
    %c0_2 = arith.constant 0 : index
    %c0_3 = arith.constant 0 : index
    %1 = vector.load %arg2[%c0_2, %c0_3] : memref<36x32xf32, #tpu.memory_space<vmem>>, vector<36x32xf32>
    %2 = vector.extract_strided_slice %1 {offsets = [0, 0], sizes = [2, 32], strides = [1, 1]} : vector<36x32xf32> to vector<2x32xf32>
    %3 = vector.extract_strided_slice %1 {offsets = [2, 0], sizes = [32, 2], strides = [1, 1]} : vector<36x32xf32> to vector<32x2xf32>
    %4 = vector.extract_strided_slice %1 {offsets = [34, 0], sizes = [1, 2], strides = [1, 1]} : vector<36x32xf32> to vector<1x2xf32>
    %5 = vector.extract_strided_slice %1 {offsets = [35, 0], sizes = [1, 32], strides = [1, 1]} : vector<36x32xf32> to vector<1x32xf32>
    %cst = arith.constant dense<0.000000e+00> : vector<2x32xf32>
    %6 = vector.multi_reduction <add>, %0, %cst [2] : vector<2x32x256xf32> to vector<2x32xf32>
    %cst_4 = arith.constant 3.906250e-03 : f32
    %7 = vector.broadcast %cst_4 : f32 to vector<2x32xf32>
    %8 = arith.mulf %6, %7 : vector<2x32xf32>
    %9 = vector.shape_cast %8 : vector<2x32xf32> to vector<2x1x32xf32>
    %10 = vector.shape_cast %2 : vector<2x32xf32> to vector<1x2x32xf32>
    %11 = vector.broadcast %9 : vector<2x1x32xf32> to vector<2x2x32xf32>
    %12 = vector.broadcast %10 : vector<1x2x32xf32> to vector<2x2x32xf32>
    %13 = arith.mulf %11, %12 : vector<2x2x32xf32>
    %cst_5 = arith.constant dense<0.000000e+00> : vector<2x2xf32>
    %14 = vector.multi_reduction <add>, %13, %cst_5 [2] : vector<2x2x32xf32> to vector<2x2xf32>
    %15 = vector.broadcast %4 : vector<1x2xf32> to vector<2x2xf32>
    %16 = arith.addf %14, %15 : vector<2x2xf32>
    %cst_6 = arith.constant 0.000000e+00 : f32
    %17 = vector.broadcast %cst_6 : f32 to vector<2x2xf32>
    %18 = arith.maximumf %16, %17 : vector<2x2xf32>
    %19 = vector.shape_cast %18 : vector<2x2xf32> to vector<2x1x2xf32>
    %20 = vector.shape_cast %3 : vector<32x2xf32> to vector<1x32x2xf32>
    %21 = vector.broadcast %19 : vector<2x1x2xf32> to vector<2x32x2xf32>
    %22 = vector.broadcast %20 : vector<1x32x2xf32> to vector<2x32x2xf32>
    %23 = arith.mulf %21, %22 : vector<2x32x2xf32>
    %cst_7 = arith.constant dense<0.000000e+00> : vector<2x32xf32>
    %24 = vector.multi_reduction <add>, %23, %cst_7 [2] : vector<2x32x2xf32> to vector<2x32xf32>
    %25 = vector.broadcast %5 : vector<1x32xf32> to vector<2x32xf32>
    %26 = arith.addf %24, %25 : vector<2x32xf32>
    %27 = arith.negf %26 : vector<2x32xf32>
    %28 = math.exp %27 : vector<2x32xf32>
    %cst_8 = arith.constant 1.000000e+00 : f32
    %29 = vector.broadcast %cst_8 : f32 to vector<2x32xf32>
    %30 = arith.addf %29, %28 : vector<2x32xf32>
    %31 = arith.divf %29, %30 : vector<2x32xf32>
    %32 = vector.shape_cast %31 : vector<2x32xf32> to vector<2x32x1xf32>
    %33 = vector.broadcast %32 : vector<2x32x1xf32> to vector<2x32x256xf32>
    %34 = arith.mulf %0, %33 : vector<2x32x256xf32>
    %c0_9 = arith.constant 0 : index
    %c0_10 = arith.constant 0 : index
    %c0_11 = arith.constant 0 : index
    %35 = vector.load %arg3[%c0_9, %c0_10, %c0_11] : memref<2x32x256xf32, #tpu.memory_space<vmem>>, vector<2x32x256xf32>
    tpu.vector_store %arg3[%c0_9, %c0_10, %c0_11], %34 {strides = array<i32>} : memref<2x32x256xf32, #tpu.memory_space<vmem>>, vector<2x32x256xf32>,
    return
  }
  func.func @transform_0(%arg0: i32) -> (i32, i32, i32) {
    %c0_i32 = arith.constant 0 : i32
    %c0_i32_0 = arith.constant 0 : i32
    %c0_i32_1 = arith.constant 0 : i32
    return %arg0, %c0_i32, %c0_i32_0 : i32, i32, i32
  }
  func.func @transform_1(%arg0: i32) -> (i32, i32) {
    %c0_i32 = arith.constant 0 : i32
    %c0_i32_0 = arith.constant 0 : i32
    %c0_i32_1 = arith.constant 0 : i32
    return %c0_i32, %c0_i32_0 : i32, i32
  }
  func.func @transform_2(%arg0: i32) -> (i32, i32, i32) {
    %c0_i32 = arith.constant 0 : i32
    %c0_i32_0 = arith.constant 0 : i32
    %c0_i32_1 = arith.constant 0 : i32
    return %arg0, %c0_i32, %c0_i32_0 : i32, i32, i32
  }
}

</mosaic_0001>

<llo_original>
// kernel: tpu_custom_call.1
$region0: #{tpu_custom_call.1}
  #allocation0 [shape = 'u32[]', space=smem, size = 0x4, offset = 0x4, fixed_abs, tag = 'smem constant byte address 0x4 - core index']
  #allocation1 [shape = 'u32[144,128]{1,0:T(1,128)}', space=vmem, size = 0x12000, scoped, tag = 'internal scratch']
  %s0 = inlined_call_operand.hbm [shape: f32[2,32,256], index: 0, kind: input, shape index: {}]
  %s1 = inlined_call_operand.vmem [shape: f32[36,32], index: 1, kind: input, shape index: {}]
  %s2 = inlined_call_operand.hbm [shape: f32[2,32,256], index: 2, kind: output, shape index: {}]
  %s3 = sld [smem:[#allocation0]]
  $region22: #{tpu_custom_call.1} parent=0
    _
  %s5 = ssub.s32 1, %s3
  %s6 = scalar_select 0, %s5, %s3
  $region1: #{tpu_custom_call.1} parent=0
    #allocation2 [shape = 'u8[65536]{0}', space=vmem, size = 0x10000, scoped, tag = 'input window, operand 0, single buffered']
    #allocation3 [shape = 's32[1]{0}', space=sflag, size = 0x4, scoped, tag = 'scoped memory for tpu_custom_call.1']
    #allocation4 [shape = 's32[1]{0}', space=sflag, size = 0x4, scoped, tag = 'scoped memory for tpu_custom_call.1']
    #allocation5 [shape = 'u8[65536]{0}', space=vmem, size = 0x10000, scoped, tag = 'output window, operand 0, single buffered']
    %7 = vsyncpa [#allocation3], 0
    %8 = vsyncpa [#allocation4], 0
    // Predicated region
    $region2: #{tpu_custom_call.1} parent=1 // pred_check
      _
    $region3: #{tpu_custom_call.1} parent=1 // pred_check_branch
      %10 = sbr.rel (0) target = $region5
    $region4: #{tpu_custom_call.1} parent=1 // pred_region
      %s12 = ssub.s32 2048, 2048
      %13 = vsyncadd [#allocation3], %s12
      %s14 = sshll.u32 [#allocation2], 4
      %s15 = int_to_ptr.vmem [resolvable:$true] %s14
      %20 = dma.hbm_to_vmem [thread:$0]  %s0, 2048, %s15, [#allocation3], 256, 256, 16
    $region5: #{tpu_custom_call.1} parent=1 // pred_fallthru
      _
    // Predicated region
    $region6: #{tpu_custom_call.1} parent=1 // pred_check
      _
    $region7: #{tpu_custom_call.1} parent=1 // pred_check_branch
      %22 = sbr.rel (0) target = $region9
    $region8: #{tpu_custom_call.1} parent=1 // pred_region
      _
    $region9: #{tpu_custom_call.1} parent=1 // pred_fallthru
      _
    // Predicated region
    $region10: #{tpu_custom_call.1} parent=1 // pred_check
      _
    $region11: #{tpu_custom_call.1} parent=1 // pred_check_branch
      %24 = sbr.rel (0) target = $region13
    $region12: #{tpu_custom_call.1} parent=1 // pred_region
      %25 = dma.done [#allocation3], 2048
    $region13: #{tpu_custom_call.1} parent=1 // pred_fallthru
      _
    %v26 = vld [vmem:[#allocation2] sm:$0xff]
    %v27 = vld [vmem:[#allocation2 + $0x8] sm:$0xff]
    %v28 = vld [vmem:[#allocation2 + $0x10] sm:$0xff]
    %v29 = vld [vmem:[#allocation2 + $0x18] sm:$0xff]
    %v30 = vld [vmem:[#allocation2 + $0x20] sm:$0xff]
    %v31 = vld [vmem:[#allocation2 + $0x28] sm:$0xff]
    %v32 = vld [vmem:[#allocation2 + $0x30] sm:$0xff]
    %v33 = vld [vmem:[#allocation2 + $0x38] sm:$0xff]
    %v34 = vld [vmem:[#allocation2 + $0x40] sm:$0xff]
    %v35 = vld [vmem:[#allocation2 + $0x48] sm:$0xff]
    %v36 = vld [vmem:[#allocation2 + $0x50] sm:$0xff]
    %v37 = vld [vmem:[#allocation2 + $0x58] sm:$0xff]
    %v38 = vld [vmem:[#allocation2 + $0x60] sm:$0xff]
    %v39 = vld [vmem:[#allocation2 + $0x68] sm:$0xff]
    %v40 = vld [vmem:[#allocation2 + $0x70] sm:$0xff]
    %v41 = vld [vmem:[#allocation2 + $0x78] sm:$0xff]
    %v42 = vld [vmem:[%s1] sm:$0xff]
    %v43 = vld [vmem:[%s1 + $0x8] sm:$0xff]
    %v44 = vld [vmem:[%s1 + $0x10] sm:$0xff]
    %v45 = vld [vmem:[%s1 + $0x18] sm:$0xff]
    %v46 = vld [vmem:[%s1 + $0x20] sm:$0xf]
    %v47 = vadd.f32 %v26, %v27
    %48 = vadd.xlane.f32.xlu0 %v47
    %v49 = vpop.xlane.xlu0 %48
    %v50 = vadd.f32 %v28, %v29
    %51 = vadd.xlane.f32.xlu0 %v50
    %v52 = vpop.xlane.xlu0 %51
    %v53 = vadd.f32 %v30, %v31
    %54 = vadd.xlane.f32.xlu0 %v53
    %v55 = vpop.xlane.xlu0 %54
    %v56 = vadd.f32 %v32, %v33
    %57 = vadd.xlane.f32.xlu0 %v56
    %v58 = vpop.xlane.xlu0 %57
    %v59 = vadd.f32 %v34, %v35
    %60 = vadd.xlane.f32.xlu0 %v59
    %v61 = vpop.xlane.xlu0 %60
    %v62 = vadd.f32 %v36, %v37
    %63 = vadd.xlane.f32.xlu0 %v62
    %v64 = vpop.xlane.xlu0 %63
    %v65 = vadd.f32 %v38, %v39
    %66 = vadd.xlane.f32.xlu0 %v65
    %v67 = vpop.xlane.xlu0 %66
    %v68 = vadd.f32 %v40, %v41
    %69 = vadd.xlane.f32.xlu0 %v68
    %v70 = vpop.xlane.xlu0 %69
    %v71 = vmul.f32 %v49, 0.00390625
    %v72 = vmul.f32 %v52, 0.00390625
    %v73 = vmul.f32 %v55, 0.00390625
    %v74 = vmul.f32 %v58, 0.00390625
    %v75 = vmul.f32 %v61, 0.00390625
    %v76 = vmul.f32 %v64, 0.00390625
    %v77 = vmul.f32 %v67, 0.00390625
    %v78 = vmul.f32 %v70, 0.00390625
    %v80 = vlaneseq
    %v81 = vshrl.u32 %v80, 7
    %v82 = vsub.s32 0, %v81
    %v83 = vrot.slane %v42, %v82
    %85 = vbcast.lane.b32.xlu0 %v83, 256
    %v86 = vpop.permute.xlu0 %85
    %s88 = sor.u32 256, 8
    %89 = vbcast.lane.b32.xlu0 %v83, %s88
    %v90 = vpop.permute.xlu0 %89
    %s92 = sor.u32 256, 16
    %93 = vbcast.lane.b32.xlu0 %v83, %s92
    %v94 = vpop.permute.xlu0 %93
    %s96 = sor.u32 256, 24
    %97 = vbcast.lane.b32.xlu0 %v83, %s96
    %v98 = vpop.permute.xlu0 %97
    %v99 = vlaneseq
    %v100 = vshrl.u32 %v99, 7
    %v101 = vsub.s32 1, %v100
    %v102 = vrot.slane %v42, %v101
    %104 = vbcast.lane.b32.xlu0 %v102, 256
    %v105 = vpop.permute.xlu0 %104
    %s107 = sor.u32 256, 8
    %108 = vbcast.lane.b32.xlu0 %v102, %s107
    %v109 = vpop.permute.xlu0 %108
    %s111 = sor.u32 256, 16
    %112 = vbcast.lane.b32.xlu0 %v102, %s111
    %v113 = vpop.permute.xlu0 %112
    %s115 = sor.u32 256, 24
    %116 = vbcast.lane.b32.xlu0 %v102, %s115
    %v117 = vpop.permute.xlu0 %116
    %v126 = vmul.f32 %v71, %v86
    %v127 = vmul.f32 %v72, %v90
    %v128 = vmul.f32 %v73, %v94
    %v129 = vmul.f32 %v74, %v98
    %v130 = vmul.f32 %v71, %v105
    %v131 = vmul.f32 %v72, %v109
    %v132 = vmul.f32 %v73, %v113
    %v133 = vmul.f32 %v74, %v117
    %v134 = vmul.f32 %v75, %v86
    %v135 = vmul.f32 %v76, %v90
    %v136 = vmul.f32 %v77, %v94
    %v137 = vmul.f32 %v78, %v98
    %v138 = vmul.f32 %v75, %v105
    %v139 = vmul.f32 %v76, %v109
    %v140 = vmul.f32 %v77, %v113
    %v141 = vmul.f32 %v78, %v117
    %158 = vset.pattern.permute.xlu0 0
    %159 = vperm.xlu0 %158, %v126
    %v160 = vpop.permute.xlu0 %159
    %161 = vset.pattern.permute.xlu0 0
    %162 = vperm.xlu0 %161, %v127
    %v163 = vpop.permute.xlu0 %162
    %164 = vset.pattern.permute.xlu0 0
    %165 = vperm.xlu0 %164, %v128
    %v166 = vpop.permute.xlu0 %165
    %167 = vset.pattern.permute.xlu0 0
    %168 = vperm.xlu0 %167, %v129
    %v169 = vpop.permute.xlu0 %168
    %170 = vset.pattern.permute.xlu0 0
    %171 = vperm.xlu0 %170, %v130
    %v172 = vpop.permute.xlu0 %171
    %173 = vset.pattern.permute.xlu0 0
    %174 = vperm.xlu0 %173, %v131
    %v175 = vpop.permute.xlu0 %174
    %176 = vset.pattern.permute.xlu0 0
    %177 = vperm.xlu0 %176, %v132
    %v178 = vpop.permute.xlu0 %177
    %179 = vset.pattern.permute.xlu0 0
    %180 = vperm.xlu0 %179, %v133
    %v181 = vpop.permute.xlu0 %180
    %182 = vset.pattern.permute.xlu0 0
    %183 = vperm.xlu0 %182, %v134
    %v184 = vpop.permute.xlu0 %183
    %185 = vset.pattern.permute.xlu0 0
    %186 = vperm.xlu0 %185, %v135
    %v187 = vpop.permute.xlu0 %186
    %188 = vset.pattern.permute.xlu0 0
    %189 = vperm.xlu0 %188, %v136
    %v190 = vpop.permute.xlu0 %189
    %191 = vset.pattern.permute.xlu0 0
    %192 = vperm.xlu0 %191, %v137
    %v193 = vpop.permute.xlu0 %192
    %194 = vset.pattern.permute.xlu0 0
    %195 = vperm.xlu0 %194, %v138
    %v196 = vpop.permute.xlu0 %195
    %197 = vset.pattern.permute.xlu0 0
    %198 = vperm.xlu0 %197, %v139
    %v199 = vpop.permute.xlu0 %198
    %200 = vset.pattern.permute.xlu0 0
    %201 = vperm.xlu0 %200, %v140
    %v202 = vpop.permute.xlu0 %201
    %203 = vset.pattern.permute.xlu0 0
    %204 = vperm.xlu0 %203, %v141
    %v205 = vpop.permute.xlu0 %204
    %v206 = vlaneseq
    %v207 = vand.u32 %v206, 127
    %v208 = vlaneseq
    %v209 = vshrl.u32 %v208, 7
    %v210 = vsub.s32 %v207, %v209
    %v211 = vrot.slane %v160, %v210
    %v212 = vadd.s32 %v207, 4294967288
    %v213 = vlaneseq
    %v214 = vshrl.u32 %v213, 7
    %v215 = vsub.s32 %v212, %v214
    %v216 = vrot.slane %v163, %v215
    %vm217 = vcmask 130112
    %v218 = vsel %vm217, %v216, %v211
    %v219 = vadd.s32 %v207, 4294967280
    %v220 = vlaneseq
    %v221 = vshrl.u32 %v220, 7
    %v222 = vsub.s32 %v219, %v221
    %v223 = vrot.slane %v166, %v222
    %vm224 = vcmask 195712
    %v225 = vsel %vm224, %v223, %v218
    %v226 = vadd.s32 %v207, 4294967272
    %v227 = vlaneseq
    %v228 = vshrl.u32 %v227, 7
    %v229 = vsub.s32 %v226, %v228
    %v230 = vrot.slane %v169, %v229
    %vm231 = vcmask 261312
    %v232 = vsel %vm231, %v230, %v225
    %v233 = vlaneseq
    %v234 = vshrl.u32 %v233, 7
    %v235 = vsub.s32 %v207, %v234
    %v236 = vrot.slane %v172, %v235
    %v237 = vlaneseq
    %v238 = vshrl.u32 %v237, 7
    %v239 = vsub.s32 %v212, %v238
    %v240 = vrot.slane %v175, %v239
    %v241 = vsel %vm217, %v240, %v236
    %v242 = vlaneseq
    %v243 = vshrl.u32 %v242, 7
    %v244 = vsub.s32 %v219, %v243
    %v245 = vrot.slane %v178, %v244
    %v246 = vsel %vm224, %v245, %v241
    %v247 = vlaneseq
    %v248 = vshrl.u32 %v247, 7
    %v249 = vsub.s32 %v226, %v248
    %v250 = vrot.slane %v181, %v249
    %v251 = vsel %vm231, %v250, %v246
    %v252 = vlaneseq
    %v253 = vshrl.u32 %v252, 7
    %v254 = vsub.s32 %v207, %v253
    %v255 = vrot.slane %v184, %v254
    %v256 = vlaneseq
    %v257 = vshrl.u32 %v256, 7
    %v258 = vsub.s32 %v212, %v257
    %v259 = vrot.slane %v187, %v258
    %v260 = vsel %vm217, %v259, %v255
    %v261 = vlaneseq
    %v262 = vshrl.u32 %v261, 7
    %v263 = vsub.s32 %v219, %v262
    %v264 = vrot.slane %v190, %v263
    %v265 = vsel %vm224, %v264, %v260
    %v266 = vlaneseq
    %v267 = vshrl.u32 %v266, 7
    %v268 = vsub.s32 %v226, %v267
    %v269 = vrot.slane %v193, %v268
    %v270 = vsel %vm231, %v269, %v265
    %v271 = vlaneseq
    %v272 = vshrl.u32 %v271, 7
    %v273 = vsub.s32 %v207, %v272
    %v274 = vrot.slane %v196, %v273
    %v275 = vlaneseq
    %v276 = vshrl.u32 %v275, 7
    %v277 = vsub.s32 %v212, %v276
    %v278 = vrot.slane %v199, %v277
    %v279 = vsel %vm217, %v278, %v274
    %v280 = vlaneseq
    %v281 = vshrl.u32 %v280, 7
    %v282 = vsub.s32 %v219, %v281
    %v283 = vrot.slane %v202, %v282
    %v284 = vsel %vm224, %v283, %v279
    %v285 = vlaneseq
    %v286 = vshrl.u32 %v285, 7
    %v287 = vsub.s32 %v226, %v286
    %v288 = vrot.slane %v205, %v287
    %v289 = vsel %vm231, %v288, %v284
    %vm290 = vcmask 1041409
    %v291 = vsel %vm290, %v251, %v232
    %v292 = vsel %vm290, %v289, %v270
    %vm295 = vcmask 254976
    %v296 = vsel %vm295, %v291, 0.0
    %297 = vadd.xlane.f32.xlu0 %v296
    %v298 = vpop.xlane.xlu0 %297
    %v299 = vsel %vm295, %v292, 0.0
    %300 = vadd.xlane.f32.xlu0 %v299
    %v301 = vpop.xlane.xlu0 %300
    %v302 = vlaneseq
    %v303 = vshrl.u32 %v302, 7
    %v304 = vsub.s32 2, %v303
    %v305 = vrot.slane %v46, %v304
    %308 = vbcast.lane.b32.xlu0 %v305, 256
    %v309 = vpop.permute.xlu0 %308
    %v311 = vadd.f32 %v298, %v309
    %v312 = vadd.f32 %v301, %v309
    %v313 = vmax.f32 %v311, 0.0
    %v314 = vmax.f32 %v312, 0.0
    %v319 = vlaneseq
    %v320 = vshrl.u32 %v319, 7
    %v321 = vsub.s32 2, %v320
    %v322 = vrot.slane %v42, %v321
    %324 = vbcast.lane.b32.xlu0 %v322, 256
    %v325 = vpop.permute.xlu0 %324
    %v326 = vlaneseq
    %v327 = vshrl.u32 %v326, 7
    %v328 = vsub.s32 3, %v327
    %v329 = vrot.slane %v42, %v328
    %331 = vbcast.lane.b32.xlu0 %v329, 256
    %v332 = vpop.permute.xlu0 %331
    %v333 = vlaneseq
    %v334 = vshrl.u32 %v333, 7
    %v335 = vsub.s32 4, %v334
    %v336 = vrot.slane %v42, %v335
    %338 = vbcast.lane.b32.xlu0 %v336, 256
    %v339 = vpop.permute.xlu0 %338
    %v340 = vlaneseq
    %v341 = vshrl.u32 %v340, 7
    %v342 = vsub.s32 5, %v341
    %v343 = vrot.slane %v42, %v342
    %345 = vbcast.lane.b32.xlu0 %v343, 256
    %v346 = vpop.permute.xlu0 %345
    %v347 = vlaneseq
    %v348 = vshrl.u32 %v347, 7
    %v349 = vsub.s32 6, %v348
    %v350 = vrot.slane %v42, %v349
    %352 = vbcast.lane.b32.xlu0 %v350, 256
    %v353 = vpop.permute.xlu0 %352
    %v354 = vlaneseq
    %v355 = vshrl.u32 %v354, 7
    %v356 = vsub.s32 7, %v355
    %v357 = vrot.slane %v42, %v356
    %359 = vbcast.lane.b32.xlu0 %v357, 256
    %v360 = vpop.permute.xlu0 %359
    %v361 = vlaneseq
    %v362 = vshrl.u32 %v361, 7
    %v363 = vsub.s32 0, %v362
    %v364 = vrot.slane %v43, %v363
    %366 = vbcast.lane.b32.xlu0 %v364, 256
    %v367 = vpop.permute.xlu0 %366
    %v368 = vlaneseq
    %v369 = vshrl.u32 %v368, 7
    %v370 = vsub.s32 1, %v369
    %v371 = vrot.slane %v43, %v370
    %373 = vbcast.lane.b32.xlu0 %v371, 256
    %v374 = vpop.permute.xlu0 %373
    %v375 = vlaneseq
    %v376 = vshrl.u32 %v375, 7
    %v377 = vsub.s32 2, %v376
    %v378 = vrot.slane %v43, %v377
    %380 = vbcast.lane.b32.xlu0 %v378, 256
    %v381 = vpop.permute.xlu0 %380
    %v382 = vlaneseq
    %v383 = vshrl.u32 %v382, 7
    %v384 = vsub.s32 3, %v383
    %v385 = vrot.slane %v43, %v384
    %387 = vbcast.lane.b32.xlu0 %v385, 256
    %v388 = vpop.permute.xlu0 %387
    %v389 = vlaneseq
    %v390 = vshrl.u32 %v389, 7
    %v391 = vsub.s32 4, %v390
    %v392 = vrot.slane %v43, %v391
    %394 = vbcast.lane.b32.xlu0 %v392, 256
    %v395 = vpop.permute.xlu0 %394
    %v396 = vlaneseq
    %v397 = vshrl.u32 %v396, 7
    %v398 = vsub.s32 5, %v397
    %v399 = vrot.slane %v43, %v398
    %401 = vbcast.lane.b32.xlu0 %v399, 256
    %v402 = vpop.permute.xlu0 %401
    %v403 = vlaneseq
    %v404 = vshrl.u32 %v403, 7
    %v405 = vsub.s32 6, %v404
    %v406 = vrot.slane %v43, %v405
    %408 = vbcast.lane.b32.xlu0 %v406, 256
    %v409 = vpop.permute.xlu0 %408
    %v410 = vlaneseq
    %v411 = vshrl.u32 %v410, 7
    %v412 = vsub.s32 7, %v411
    %v413 = vrot.slane %v43, %v412
    %415 = vbcast.lane.b32.xlu0 %v413, 256
    %v416 = vpop.permute.xlu0 %415
    %v417 = vlaneseq
    %v418 = vshrl.u32 %v417, 7
    %v419 = vsub.s32 0, %v418
    %v420 = vrot.slane %v44, %v419
    %422 = vbcast.lane.b32.xlu0 %v420, 256
    %v423 = vpop.permute.xlu0 %422
    %v424 = vlaneseq
    %v425 = vshrl.u32 %v424, 7
    %v426 = vsub.s32 1, %v425
    %v427 = vrot.slane %v44, %v426
    %429 = vbcast.lane.b32.xlu0 %v427, 256
    %v430 = vpop.permute.xlu0 %429
    %v431 = vlaneseq
    %v432 = vshrl.u32 %v431, 7
    %v433 = vsub.s32 2, %v432
    %v434 = vrot.slane %v44, %v433
    %436 = vbcast.lane.b32.xlu0 %v434, 256
    %v437 = vpop.permute.xlu0 %436
    %v438 = vlaneseq
    %v439 = vshrl.u32 %v438, 7
    %v440 = vsub.s32 3, %v439
    %v441 = vrot.slane %v44, %v440
    %443 = vbcast.lane.b32.xlu0 %v441, 256
    %v444 = vpop.permute.xlu0 %443
    %v445 = vlaneseq
    %v446 = vshrl.u32 %v445, 7
    %v447 = vsub.s32 4, %v446
    %v448 = vrot.slane %v44, %v447
    %450 = vbcast.lane.b32.xlu0 %v448, 256
    %v451 = vpop.permute.xlu0 %450
    %v452 = vlaneseq
    %v453 = vshrl.u32 %v452, 7
    %v454 = vsub.s32 5, %v453
    %v455 = vrot.slane %v44, %v454
    %457 = vbcast.lane.b32.xlu0 %v455, 256
    %v458 = vpop.permute.xlu0 %457
    %v459 = vlaneseq
    %v460 = vshrl.u32 %v459, 7
    %v461 = vsub.s32 6, %v460
    %v462 = vrot.slane %v44, %v461
    %464 = vbcast.lane.b32.xlu0 %v462, 256
    %v465 = vpop.permute.xlu0 %464
    %v466 = vlaneseq
    %v467 = vshrl.u32 %v466, 7
    %v468 = vsub.s32 7, %v467
    %v469 = vrot.slane %v44, %v468
    %471 = vbcast.lane.b32.xlu0 %v469, 256
    %v472 = vpop.permute.xlu0 %471
    %v473 = vlaneseq
    %v474 = vshrl.u32 %v473, 7
    %v475 = vsub.s32 0, %v474
    %v476 = vrot.slane %v45, %v475
    %478 = vbcast.lane.b32.xlu0 %v476, 256
    %v479 = vpop.permute.xlu0 %478
    %v480 = vlaneseq
    %v481 = vshrl.u32 %v480, 7
    %v482 = vsub.s32 1, %v481
    %v483 = vrot.slane %v45, %v482
    %485 = vbcast.lane.b32.xlu0 %v483, 256
    %v486 = vpop.permute.xlu0 %485
    %v487 = vlaneseq
    %v488 = vshrl.u32 %v487, 7
    %v489 = vsub.s32 2, %v488
    %v490 = vrot.slane %v45, %v489
    %492 = vbcast.lane.b32.xlu0 %v490, 256
    %v493 = vpop.permute.xlu0 %492
    %v494 = vlaneseq
    %v495 = vshrl.u32 %v494, 7
    %v496 = vsub.s32 3, %v495
    %v497 = vrot.slane %v45, %v496
    %499 = vbcast.lane.b32.xlu0 %v497, 256
    %v500 = vpop.permute.xlu0 %499
    %v501 = vlaneseq
    %v502 = vshrl.u32 %v501, 7
    %v503 = vsub.s32 4, %v502
    %v504 = vrot.slane %v45, %v503
    %506 = vbcast.lane.b32.xlu0 %v504, 256
    %v507 = vpop.permute.xlu0 %506
    %v508 = vlaneseq
    %v509 = vshrl.u32 %v508, 7
    %v510 = vsub.s32 5, %v509
    %v511 = vrot.slane %v45, %v510
    %513 = vbcast.lane.b32.xlu0 %v511, 256
    %v514 = vpop.permute.xlu0 %513
    %v515 = vlaneseq
    %v516 = vshrl.u32 %v515, 7
    %v517 = vsub.s32 6, %v516
    %v518 = vrot.slane %v45, %v517
    %520 = vbcast.lane.b32.xlu0 %v518, 256
    %v521 = vpop.permute.xlu0 %520
    %v522 = vlaneseq
    %v523 = vshrl.u32 %v522, 7
    %v524 = vsub.s32 7, %v523
    %v525 = vrot.slane %v45, %v524
    %527 = vbcast.lane.b32.xlu0 %v525, 256
    %v528 = vpop.permute.xlu0 %527
    %v529 = vlaneseq
    %v530 = vshrl.u32 %v529, 7
    %v531 = vsub.s32 0, %v530
    %v532 = vrot.slane %v46, %v531
    %534 = vbcast.lane.b32.xlu0 %v532, 256
    %v535 = vpop.permute.xlu0 %534
    %v536 = vlaneseq
    %v537 = vshrl.u32 %v536, 7
    %v538 = vsub.s32 1, %v537
    %v539 = vrot.slane %v46, %v538
    %541 = vbcast.lane.b32.xlu0 %v539, 256
    %v542 = vpop.permute.xlu0 %541
    %v575 = vmul.f32 %v313, %v325
    %v576 = vmul.f32 %v313, %v332
    %v577 = vmul.f32 %v313, %v339
    %v578 = vmul.f32 %v313, %v346
    %v579 = vmul.f32 %v313, %v353
    %v580 = vmul.f32 %v313, %v360
    %v581 = vmul.f32 %v313, %v367
    %v582 = vmul.f32 %v313, %v374
    %v583 = vmul.f32 %v313, %v381
    %v584 = vmul.f32 %v313, %v388
    %v585 = vmul.f32 %v313, %v395
    %v586 = vmul.f32 %v313, %v402
    %v587 = vmul.f32 %v313, %v409
    %v588 = vmul.f32 %v313, %v416
    %v589 = vmul.f32 %v313, %v423
    %v590 = vmul.f32 %v313, %v430
    %v591 = vmul.f32 %v313, %v437
    %v592 = vmul.f32 %v313, %v444
    %v593 = vmul.f32 %v313, %v451
    %v594 = vmul.f32 %v313, %v458
    %v595 = vmul.f32 %v313, %v465
    %v596 = vmul.f32 %v313, %v472
    %v597 = vmul.f32 %v313, %v479
    %v598 = vmul.f32 %v313, %v486
    %v599 = vmul.f32 %v313, %v493
    %v600 = vmul.f32 %v313, %v500
    %v601 = vmul.f32 %v313, %v507
    %v602 = vmul.f32 %v313, %v514
    %v603 = vmul.f32 %v313, %v521
    %v604 = vmul.f32 %v313, %v528
    %v605 = vmul.f32 %v313, %v535
    %v606 = vmul.f32 %v313, %v542
    %v607 = vmul.f32 %v314, %v325
    %v608 = vmul.f32 %v314, %v332
    %v609 = vmul.f32 %v314, %v339
    %v610 = vmul.f32 %v314, %v346
    %v611 = vmul.f32 %v314, %v353
    %v612 = vmul.f32 %v314, %v360
    %v613 = vmul.f32 %v314, %v367
    %v614 = vmul.f32 %v314, %v374
    %v615 = vmul.f32 %v314, %v381
    %v616 = vmul.f32 %v314, %v388
    %v617 = vmul.f32 %v314, %v395
    %v618 = vmul.f32 %v314, %v402
    %v619 = vmul.f32 %v314, %v409
    %v620 = vmul.f32 %v314, %v416
    %v621 = vmul.f32 %v314, %v423
    %v622 = vmul.f32 %v314, %v430
    %v623 = vmul.f32 %v314, %v437
    %v624 = vmul.f32 %v314, %v444
    %v625 = vmul.f32 %v314, %v451
    %v626 = vmul.f32 %v314, %v458
    %v627 = vmul.f32 %v314, %v465
    %v628 = vmul.f32 %v314, %v472
    %v629 = vmul.f32 %v314, %v479
    %v630 = vmul.f32 %v314, %v486
    %v631 = vmul.f32 %v314, %v493
    %v632 = vmul.f32 %v314, %v500
    %v633 = vmul.f32 %v314, %v507
    %v634 = vmul.f32 %v314, %v514
    %v635 = vmul.f32 %v314, %v521
    %v636 = vmul.f32 %v314, %v528
    %v637 = vmul.f32 %v314, %v535
    %v638 = vmul.f32 %v314, %v542
    %703 = vset.pattern.permute.xlu0 0
    %704 = vperm.xlu0 %703, %v575
    %v705 = vpop.permute.xlu0 %704
    %706 = vset.pattern.permute.xlu0 0
    %707 = vperm.xlu0 %706, %v576
    %v708 = vpop.permute.xlu0 %707
    %709 = vset.pattern.permute.xlu0 0
    %710 = vperm.xlu0 %709, %v577
    %v711 = vpop.permute.xlu0 %710
    %712 = vset.pattern.permute.xlu0 0
    %713 = vperm.xlu0 %712, %v578
    %v714 = vpop.permute.xlu0 %713
    %715 = vset.pattern.permute.xlu0 0
    %716 = vperm.xlu0 %715, %v579
    %v717 = vpop.permute.xlu0 %716
    %718 = vset.pattern.permute.xlu0 0
    %719 = vperm.xlu0 %718, %v580
    %v720 = vpop.permute.xlu0 %719
    %721 = vset.pattern.permute.xlu0 0
    %722 = vperm.xlu0 %721, %v581
    %v723 = vpop.permute.xlu0 %722
    %724 = vset.pattern.permute.xlu0 0
    %725 = vperm.xlu0 %724, %v582
    %v726 = vpop.permute.xlu0 %725
    %727 = vset.pattern.permute.xlu0 0
    %728 = vperm.xlu0 %727, %v583
    %v729 = vpop.permute.xlu0 %728
    %730 = vset.pattern.permute.xlu0 0
    %731 = vperm.xlu0 %730, %v584
    %v732 = vpop.permute.xlu0 %731
    %733 = vset.pattern.permute.xlu0 0
    %734 = vperm.xlu0 %733, %v585
    %v735 = vpop.permute.xlu0 %734
    %736 = vset.pattern.permute.xlu0 0
    %737 = vperm.xlu0 %736, %v586
    %v738 = vpop.permute.xlu0 %737
    %739 = vset.pattern.permute.xlu0 0
    %740 = vperm.xlu0 %739, %v587
    %v741 = vpop.permute.xlu0 %740
    %742 = vset.pattern.permute.xlu0 0
    %743 = vperm.xlu0 %742, %v588
    %v744 = vpop.permute.xlu0 %743
    %745 = vset.pattern.permute.xlu0 0
    %746 = vperm.xlu0 %745, %v589
    %v747 = vpop.permute.xlu0 %746
    %748 = vset.pattern.permute.xlu0 0
    %749 = vperm.xlu0 %748, %v590
    %v750 = vpop.permute.xlu0 %749
    %751 = vset.pattern.permute.xlu0 0
    %752 = vperm.xlu0 %751, %v591
    %v753 = vpop.permute.xlu0 %752
    %754 = vset.pattern.permute.xlu0 0
    %755 = vperm.xlu0 %754, %v592
    %v756 = vpop.permute.xlu0 %755
    %757 = vset.pattern.permute.xlu0 0
    %758 = vperm.xlu0 %757, %v593
    %v759 = vpop.permute.xlu0 %758
    %760 = vset.pattern.permute.xlu0 0
    %761 = vperm.xlu0 %760, %v594
    %v762 = vpop.permute.xlu0 %761
    %763 = vset.pattern.permute.xlu0 0
    %764 = vperm.xlu0 %763, %v595
    %v765 = vpop.permute.xlu0 %764
    %766 = vset.pattern.permute.xlu0 0
    %767 = vperm.xlu0 %766, %v596
    %v768 = vpop.permute.xlu0 %767
    %769 = vset.pattern.permute.xlu0 0
    %770 = vperm.xlu0 %769, %v597
    %v771 = vpop.permute.xlu0 %770
    %772 = vset.pattern.permute.xlu0 0
    %773 = vperm.xlu0 %772, %v598
    %v774 = vpop.permute.xlu0 %773
    %775 = vset.pattern.permute.xlu0 0
    %776 = vperm.xlu0 %775, %v599
    %v777 = vpop.permute.xlu0 %776
    %778 = vset.pattern.permute.xlu0 0
    %779 = vperm.xlu0 %778, %v600
    %v780 = vpop.permute.xlu0 %779
    %781 = vset.pattern.permute.xlu0 0
    %782 = vperm.xlu0 %781, %v601
    %v783 = vpop.permute.xlu0 %782
    %784 = vset.pattern.permute.xlu0 0
    %785 = vperm.xlu0 %784, %v602
    %v786 = vpop.permute.xlu0 %785
    %787 = vset.pattern.permute.xlu0 0
    %788 = vperm.xlu0 %787, %v603
    %v789 = vpop.permute.xlu0 %788
    %790 = vset.pattern.permute.xlu0 0
    %791 = vperm.xlu0 %790, %v604
    %v792 = vpop.permute.xlu0 %791
    %793 = vset.pattern.permute.xlu0 0
    %794 = vperm.xlu0 %793, %v605
    %v795 = vpop.permute.xlu0 %794
    %796 = vset.pattern.permute.xlu0 0
    %797 = vperm.xlu0 %796, %v606
    %v798 = vpop.permute.xlu0 %797
    %799 = vset.pattern.permute.xlu0 0
    %800 = vperm.xlu0 %799, %v607
    %v801 = vpop.permute.xlu0 %800
    %802 = vset.pattern.permute.xlu0 0
    %803 = vperm.xlu0 %802, %v608
    %v804 = vpop.permute.xlu0 %803
    %805 = vset.pattern.permute.xlu0 0
    %806 = vperm.xlu0 %805, %v609
    %v807 = vpop.permute.xlu0 %806
    %808 = vset.pattern.permute.xlu0 0
    %809 = vperm.xlu0 %808, %v610
    %v810 = vpop.permute.xlu0 %809
    %811 = vset.pattern.permute.xlu0 0
    %812 = vperm.xlu0 %811, %v611
    %v813 = vpop.permute.xlu0 %812
    %814 = vset.pattern.permute.xlu0 0
    %815 = vperm.xlu0 %814, %v612
    %v816 = vpop.permute.xlu0 %815
    %817 = vset.pattern.permute.xlu0 0
    %818 = vperm.xlu0 %817, %v613
    %v819 = vpop.permute.xlu0 %818
    %820 = vset.pattern.permute.xlu0 0
    %821 = vperm.xlu0 %820, %v614
    %v822 = vpop.permute.xlu0 %821
    %823 = vset.pattern.permute.xlu0 0
    %824 = vperm.xlu0 %823, %v615
    %v825 = vpop.permute.xlu0 %824
    %826 = vset.pattern.permute.xlu0 0
    %827 = vperm.xlu0 %826, %v616
    %v828 = vpop.permute.xlu0 %827
    %829 = vset.pattern.permute.xlu0 0
    %830 = vperm.xlu0 %829, %v617
    %v831 = vpop.permute.xlu0 %830
    %832 = vset.pattern.permute.xlu0 0
    %833 = vperm.xlu0 %832, %v618
    %v834 = vpop.permute.xlu0 %833
    %835 = vset.pattern.permute.xlu0 0
    %836 = vperm.xlu0 %835, %v619
    %v837 = vpop.permute.xlu0 %836
    %838 = vset.pattern.permute.xlu0 0
    %839 = vperm.xlu0 %838, %v620
    %v840 = vpop.permute.xlu0 %839
    %841 = vset.pattern.permute.xlu0 0
    %842 = vperm.xlu0 %841, %v621
    %v843 = vpop.permute.xlu0 %842
    %844 = vset.pattern.permute.xlu0 0
    %845 = vperm.xlu0 %844, %v622
    %v846 = vpop.permute.xlu0 %845
    %847 = vset.pattern.permute.xlu0 0
    %848 = vperm.xlu0 %847, %v623
    %v849 = vpop.permute.xlu0 %848
    %850 = vset.pattern.permute.xlu0 0
    %851 = vperm.xlu0 %850, %v624
    %v852 = vpop.permute.xlu0 %851
    %853 = vset.pattern.permute.xlu0 0
    %854 = vperm.xlu0 %853, %v625
    %v855 = vpop.permute.xlu0 %854
    %856 = vset.pattern.permute.xlu0 0
    %857 = vperm.xlu0 %856, %v626
    %v858 = vpop.permute.xlu0 %857
    %859 = vset.pattern.permute.xlu0 0
    %860 = vperm.xlu0 %859, %v627
    %v861 = vpop.permute.xlu0 %860
    %862 = vset.pattern.permute.xlu0 0
    %863 = vperm.xlu0 %862, %v628
    %v864 = vpop.permute.xlu0 %863
    %865 = vset.pattern.permute.xlu0 0
    %866 = vperm.xlu0 %865, %v629
    %v867 = vpop.permute.xlu0 %866
    %868 = vset.pattern.permute.xlu0 0
    %869 = vperm.xlu0 %868, %v630
    %v870 = vpop.permute.xlu0 %869
    %871 = vset.pattern.permute.xlu0 0
    %872 = vperm.xlu0 %871, %v631
    %v873 = vpop.permute.xlu0 %872
    %874 = vset.pattern.permute.xlu0 0
    %875 = vperm.xlu0 %874, %v632
    %v876 = vpop.permute.xlu0 %875
    %877 = vset.pattern.permute.xlu0 0
    %878 = vperm.xlu0 %877, %v633
    %v879 = vpop.permute.xlu0 %878
    %880 = vset.pattern.permute.xlu0 0
    %881 = vperm.xlu0 %880, %v634
    %v882 = vpop.permute.xlu0 %881
    %883 = vset.pattern.permute.xlu0 0
    %884 = vperm.xlu0 %883, %v635
    %v885 = vpop.permute.xlu0 %884
    %886 = vset.pattern.permute.xlu0 0
    %887 = vperm.xlu0 %886, %v636
    %v888 = vpop.permute.xlu0 %887
    %889 = vset.pattern.permute.xlu0 0
    %890 = vperm.xlu0 %889, %v637
    %v891 = vpop.permute.xlu0 %890
    %892 = vset.pattern.permute.xlu0 0
    %893 = vperm.xlu0 %892, %v638
    %v894 = vpop.permute.xlu0 %893
    %v895 = vlaneseq
    %v896 = vshrl.u32 %v895, 7
    %v897 = vsub.s32 %v207, %v896
    %v898 = vrot.slane %v705, %v897
    %v899 = vlaneseq
    %v900 = vshrl.u32 %v899, 7
    %v901 = vsub.s32 %v207, %v900
    %v902 = vrot.slane %v708, %v901
    %v903 = vlaneseq
    %v904 = vshrl.u32 %v903, 7
    %v905 = vsub.s32 %v207, %v904
    %v906 = vrot.slane %v711, %v905
    %v907 = vlaneseq
    %v908 = vshrl.u32 %v907, 7
    %v909 = vsub.s32 %v207, %v908
    %v910 = vrot.slane %v714, %v909
    %v911 = vlaneseq
    %v912 = vshrl.u32 %v911, 7
    %v913 = vsub.s32 %v207, %v912
    %v914 = vrot.slane %v717, %v913
    %v915 = vlaneseq
    %v916 = vshrl.u32 %v915, 7
    %v917 = vsub.s32 %v207, %v916
    %v918 = vrot.slane %v720, %v917
    %v919 = vlaneseq
    %v920 = vshrl.u32 %v919, 7
    %v921 = vsub.s32 %v207, %v920
    %v922 = vrot.slane %v723, %v921
    %v923 = vlaneseq
    %v924 = vshrl.u32 %v923, 7
    %v925 = vsub.s32 %v207, %v924
    %v926 = vrot.slane %v726, %v925
    %v927 = vlaneseq
    %v928 = vshrl.u32 %v927, 7
    %v929 = vsub.s32 %v207, %v928
    %v930 = vrot.slane %v729, %v929
    %v931 = vlaneseq
    %v932 = vshrl.u32 %v931, 7
    %v933 = vsub.s32 %v207, %v932
    %v934 = vrot.slane %v732, %v933
    %v935 = vlaneseq
    %v936 = vshrl.u32 %v935, 7
    %v937 = vsub.s32 %v207, %v936
    %v938 = vrot.slane %v735, %v937
    %v939 = vlaneseq
    %v940 = vshrl.u32 %v939, 7
    %v941 = vsub.s32 %v207, %v940
    %v942 = vrot.slane %v738, %v941
    %v943 = vlaneseq
    %v944 = vshrl.u32 %v943, 7
    %v945 = vsub.s32 %v207, %v944
    %v946 = vrot.slane %v741, %v945
    %v947 = vlaneseq
    %v948 = vshrl.u32 %v947, 7
    %v949 = vsub.s32 %v207, %v948
    %v950 = vrot.slane %v744, %v949
    %v951 = vlaneseq
    %v952 = vshrl.u32 %v951, 7
    %v953 = vsub.s32 %v207, %v952
    %v954 = vrot.slane %v747, %v953
    %v955 = vlaneseq
    %v956 = vshrl.u32 %v955, 7
    %v957 = vsub.s32 %v207, %v956
    %v958 = vrot.slane %v750, %v957
    %v959 = vlaneseq
    %v960 = vshrl.u32 %v959, 7
    %v961 = vsub.s32 %v207, %v960
    %v962 = vrot.slane %v753, %v961
    %v963 = vlaneseq
    %v964 = vshrl.u32 %v963, 7
    %v965 = vsub.s32 %v207, %v964
    %v966 = vrot.slane %v756, %v965
    %v967 = vlaneseq
    %v968 = vshrl.u32 %v967, 7
    %v969 = vsub.s32 %v207, %v968
    %v970 = vrot.slane %v759, %v969
    %v971 = vlaneseq
    %v972 = vshrl.u32 %v971, 7
    %v973 = vsub.s32 %v207, %v972
    %v974 = vrot.slane %v762, %v973
    %v975 = vlaneseq
    %v976 = vshrl.u32 %v975, 7
    %v977 = vsub.s32 %v207, %v976
    %v978 = vrot.slane %v765, %v977
    %v979 = vlaneseq
    %v980 = vshrl.u32 %v979, 7
    %v981 = vsub.s32 %v207, %v980
    %v982 = vrot.slane %v768, %v981
    %v983 = vlaneseq
    %v984 = vshrl.u32 %v983, 7
    %v985 = vsub.s32 %v207, %v984
    %v986 = vrot.slane %v771, %v985
    %v987 = vlaneseq
    %v988 = vshrl.u32 %v987, 7
    %v989 = vsub.s32 %v207, %v988
    %v990 = vrot.slane %v774, %v989
    %v991 = vlaneseq
    %v992 = vshrl.u32 %v991, 7
    %v993 = vsub.s32 %v207, %v992
    %v994 = vrot.slane %v777, %v993
    %v995 = vlaneseq
    %v996 = vshrl.u32 %v995, 7
    %v997 = vsub.s32 %v207, %v996
    %v998 = vrot.slane %v780, %v997
    %v999 = vlaneseq
    %v1000 = vshrl.u32 %v999, 7
    %v1001 = vsub.s32 %v207, %v1000
    %v1002 = vrot.slane %v783, %v1001
    %v1003 = vlaneseq
    %v1004 = vshrl.u32 %v1003, 7
    %v1005 = vsub.s32 %v207, %v1004
    %v1006 = vrot.slane %v786, %v1005
    %v1007 = vlaneseq
    %v1008 = vshrl.u32 %v1007, 7
    %v1009 = vsub.s32 %v207, %v1008
    %v1010 = vrot.slane %v789, %v1009
    %v1011 = vlaneseq
    %v1012 = vshrl.u32 %v1011, 7
    %v1013 = vsub.s32 %v207, %v1012
    %v1014 = vrot.slane %v792, %v1013
    %v1015 = vlaneseq
    %v1016 = vshrl.u32 %v1015, 7
    %v1017 = vsub.s32 %v207, %v1016
    %v1018 = vrot.slane %v795, %v1017
    %v1019 = vlaneseq
    %v1020 = vshrl.u32 %v1019, 7
    %v1021 = vsub.s32 %v207, %v1020
    %v1022 = vrot.slane %v798, %v1021
    %v1023 = vlaneseq
    %v1024 = vshrl.u32 %v1023, 7
    %v1025 = vsub.s32 %v207, %v1024
    %v1026 = vrot.slane %v801, %v1025
    %v1027 = vlaneseq
    %v1028 = vshrl.u32 %v1027, 7
    %v1029 = vsub.s32 %v207, %v1028
    %v1030 = vrot.slane %v804, %v1029
    %v1031 = vlaneseq
    %v1032 = vshrl.u32 %v1031, 7
    %v1033 = vsub.s32 %v207, %v1032
    %v1034 = vrot.slane %v807, %v1033
    %v1035 = vlaneseq
    %v1036 = vshrl.u32 %v1035, 7
    %v1037 = vsub.s32 %v207, %v1036
    %v1038 = vrot.slane %v810, %v1037
    %v1039 = vlaneseq
    %v1040 = vshrl.u32 %v1039, 7
    %v1041 = vsub.s32 %v207, %v1040
    %v1042 = vrot.slane %v813, %v1041
    %v1043 = vlaneseq
    %v1044 = vshrl.u32 %v1043, 7
    %v1045 = vsub.s32 %v207, %v1044
    %v1046 = vrot.slane %v816, %v1045
    %v1047 = vlaneseq
    %v1048 = vshrl.u32 %v1047, 7
    %v1049 = vsub.s32 %v207, %v1048
    %v1050 = vrot.slane %v819, %v1049
    %v1051 = vlaneseq
    %v1052 = vshrl.u32 %v1051, 7
    %v1053 = vsub.s32 %v207, %v1052
    %v1054 = vrot.slane %v822, %v1053
    %v1055 = vlaneseq
    %v1056 = vshrl.u32 %v1055, 7
    %v1057 = vsub.s32 %v207, %v1056
    %v1058 = vrot.slane %v825, %v1057
    %v1059 = vlaneseq
    %v1060 = vshrl.u32 %v1059, 7
    %v1061 = vsub.s32 %v207, %v1060
    %v1062 = vrot.slane %v828, %v1061
    %v1063 = vlaneseq
    %v1064 = vshrl.u32 %v1063, 7
    %v1065 = vsub.s32 %v207, %v1064
    %v1066 = vrot.slane %v831, %v1065
    %v1067 = vlaneseq
    %v1068 = vshrl.u32 %v1067, 7
    %v1069 = vsub.s32 %v207, %v1068
    %v1070 = vrot.slane %v834, %v1069
    %v1071 = vlaneseq
    %v1072 = vshrl.u32 %v1071, 7
    %v1073 = vsub.s32 %v207, %v1072
    %v1074 = vrot.slane %v837, %v1073
    %v1075 = vlaneseq
    %v1076 = vshrl.u32 %v1075, 7
    %v1077 = vsub.s32 %v207, %v1076
    %v1078 = vrot.slane %v840, %v1077
    %v1079 = vlaneseq
    %v1080 = vshrl.u32 %v1079, 7
    %v1081 = vsub.s32 %v207, %v1080
    %v1082 = vrot.slane %v843, %v1081
    %v1083 = vlaneseq
    %v1084 = vshrl.u32 %v1083, 7
    %v1085 = vsub.s32 %v207, %v1084
    %v1086 = vrot.slane %v846, %v1085
    %v1087 = vlaneseq
    %v1088 = vshrl.u32 %v1087, 7
    %v1089 = vsub.s32 %v207, %v1088
    %v1090 = vrot.slane %v849, %v1089
    %v1091 = vlaneseq
    %v1092 = vshrl.u32 %v1091, 7
    %v1093 = vsub.s32 %v207, %v1092
    %v1094 = vrot.slane %v852, %v1093
    %v1095 = vlaneseq
    %v1096 = vshrl.u32 %v1095, 7
    %v1097 = vsub.s32 %v207, %v1096
    %v1098 = vrot.slane %v855, %v1097
    %v1099 = vlaneseq
    %v1100 = vshrl.u32 %v1099, 7
    %v1101 = vsub.s32 %v207, %v1100
    %v1102 = vrot.slane %v858, %v1101
    %v1103 = vlaneseq
    %v1104 = vshrl.u32 %v1103, 7
    %v1105 = vsub.s32 %v207, %v1104
    %v1106 = vrot.slane %v861, %v1105
    %v1107 = vlaneseq
    %v1108 = vshrl.u32 %v1107, 7
    %v1109 = vsub.s32 %v207, %v1108
    %v1110 = vrot.slane %v864, %v1109
    %v1111 = vlaneseq
    %v1112 = vshrl.u32 %v1111, 7
    %v1113 = vsub.s32 %v207, %v1112
    %v1114 = vrot.slane %v867, %v1113
    %v1115 = vlaneseq
    %v1116 = vshrl.u32 %v1115, 7
    %v1117 = vsub.s32 %v207, %v1116
    %v1118 = vrot.slane %v870, %v1117
    %v1119 = vlaneseq
    %v1120 = vshrl.u32 %v1119, 7
    %v1121 = vsub.s32 %v207, %v1120
    %v1122 = vrot.slane %v873, %v1121
    %v1123 = vlaneseq
    %v1124 = vshrl.u32 %v1123, 7
    %v1125 = vsub.s32 %v207, %v1124
    %v1126 = vrot.slane %v876, %v1125
    %v1127 = vlaneseq
    %v1128 = vshrl.u32 %v1127, 7
    %v1129 = vsub.s32 %v207, %v1128
    %v1130 = vrot.slane %v879, %v1129
    %v1131 = vlaneseq
    %v1132 = vshrl.u32 %v1131, 7
    %v1133 = vsub.s32 %v207, %v1132
    %v1134 = vrot.slane %v882, %v1133
    %v1135 = vlaneseq
    %v1136 = vshrl.u32 %v1135, 7
    %v1137 = vsub.s32 %v207, %v1136
    %v1138 = vrot.slane %v885, %v1137
    %v1139 = vlaneseq
    %v1140 = vshrl.u32 %v1139, 7
    %v1141 = vsub.s32 %v207, %v1140
    %v1142 = vrot.slane %v888, %v1141
    %v1143 = vlaneseq
    %v1144 = vshrl.u32 %v1143, 7
    %v1145 = vsub.s32 %v207, %v1144
    %v1146 = vrot.slane %v891, %v1145
    %v1147 = vlaneseq
    %v1148 = vshrl.u32 %v1147, 7
    %v1149 = vsub.s32 %v207, %v1148
    %v1150 = vrot.slane %v894, %v1149
    %v1151 = vsel %vm290, %v902, %v898
    %vm1152 = vcmask 1042434
    %v1153 = vsel %vm1152, %v906, %v1151
    %vm1154 = vcmask 1043459
    %v1155 = vsel %vm1154, %v910, %v1153
    %vm1156 = vcmask 1044484
    %v1157 = vsel %vm1156, %v914, %v1155
    %vm1158 = vcmask 1045509
    %v1159 = vsel %vm1158, %v918, %v1157
    %vm1160 = vcmask 1046534
    %v1161 = vsel %vm1160, %v922, %v1159
    %vm1162 = vcmask 1047559
    %v1163 = vsel %vm1162, %v926, %v1161
    %v1164 = vsel %vm290, %v934, %v930
    %v1165 = vsel %vm1152, %v938, %v1164
    %v1166 = vsel %vm1154, %v942, %v1165
    %v1167 = vsel %vm1156, %v946, %v1166
    %v1168 = vsel %vm1158, %v950, %v1167
    %v1169 = vsel %vm1160, %v954, %v1168
    %v1170 = vsel %vm1162, %v958, %v1169
    %v1171 = vsel %vm290, %v966, %v962
    %v1172 = vsel %vm1152, %v970, %v1171
    %v1173 = vsel %vm1154, %v974, %v1172
    %v1174 = vsel %vm1156, %v978, %v1173
    %v1175 = vsel %vm1158, %v982, %v1174
    %v1176 = vsel %vm1160, %v986, %v1175
    %v1177 = vsel %vm1162, %v990, %v1176
    %v1178 = vsel %vm290, %v998, %v994
    %v1179 = vsel %vm1152, %v1002, %v1178
    %v1180 = vsel %vm1154, %v1006, %v1179
    %v1181 = vsel %vm1156, %v1010, %v1180
    %v1182 = vsel %vm1158, %v1014, %v1181
    %v1183 = vsel %vm1160, %v1018, %v1182
    %v1184 = vsel %vm1162, %v1022, %v1183
    %v1185 = vsel %vm290, %v1030, %v1026
    %v1186 = vsel %vm1152, %v1034, %v1185
    %v1187 = vsel %vm1154, %v1038, %v1186
    %v1188 = vsel %vm1156, %v1042, %v1187
    %v1189 = vsel %vm1158, %v1046, %v1188
    %v1190 = vsel %vm1160, %v1050, %v1189
    %v1191 = vsel %vm1162, %v1054, %v1190
    %v1192 = vsel %vm290, %v1062, %v1058
    %v1193 = vsel %vm1152, %v1066, %v1192
    %v1194 = vsel %vm1154, %v1070, %v1193
    %v1195 = vsel %vm1156, %v1074, %v1194
    %v1196 = vsel %vm1158, %v1078, %v1195
    %v1197 = vsel %vm1160, %v1082, %v1196
    %v1198 = vsel %vm1162, %v1086, %v1197
    %v1199 = vsel %vm290, %v1094, %v1090
    %v1200 = vsel %vm1152, %v1098, %v1199
    %v1201 = vsel %vm1154, %v1102, %v1200
    %v1202 = vsel %vm1156, %v1106, %v1201
    %v1203 = vsel %vm1158, %v1110, %v1202
    %v1204 = vsel %vm1160, %v1114, %v1203
    %v1205 = vsel %vm1162, %v1118, %v1204
    %v1206 = vsel %vm290, %v1126, %v1122
    %v1207 = vsel %vm1152, %v1130, %v1206
    %v1208 = vsel %vm1154, %v1134, %v1207
    %v1209 = vsel %vm1156, %v1138, %v1208
    %v1210 = vsel %vm1158, %v1142, %v1209
    %v1211 = vsel %vm1160, %v1146, %v1210
    %v1212 = vsel %vm1162, %v1150, %v1211
    %vm1221 = vcmask 15360
    %v1222 = vsel %vm1221, %v1163, 0.0
    %1223 = vadd.xlane.f32.xlu0 %v1222
    %v1224 = vpop.xlane.xlu0 %1223
    %v1225 = vsel %vm1221, %v1170, 0.0
    %1226 = vadd.xlane.f32.xlu0 %v1225
    %v1227 = vpop.xlane.xlu0 %1226
    %v1228 = vsel %vm1221, %v1177, 0.0
    %1229 = vadd.xlane.f32.xlu0 %v1228
    %v1230 = vpop.xlane.xlu0 %1229
    %v1231 = vsel %vm1221, %v1184, 0.0
    %1232 = vadd.xlane.f32.xlu0 %v1231
    %v1233 = vpop.xlane.xlu0 %1232
    %v1234 = vsel %vm1221, %v1191, 0.0
    %1235 = vadd.xlane.f32.xlu0 %v1234
    %v1236 = vpop.xlane.xlu0 %1235
    %v1237 = vsel %vm1221, %v1198, 0.0
    %1238 = vadd.xlane.f32.xlu0 %v1237
    %v1239 = vpop.xlane.xlu0 %1238
    %v1240 = vsel %vm1221, %v1205, 0.0
    %1241 = vadd.xlane.f32.xlu0 %v1240
    %v1242 = vpop.xlane.xlu0 %1241
    %v1243 = vsel %vm1221, %v1212, 0.0
    %1244 = vadd.xlane.f32.xlu0 %v1243
    %v1245 = vpop.xlane.xlu0 %1244
    %v1246 = vlaneseq
    %v1247 = vshrl.u32 %v1246, 7
    %v1248 = vsub.s32 3, %v1247
    %v1249 = vrot.slane %v46, %v1248
    %1252 = vbcast.lane.b32.xlu0 %v1249, 256
    %v1253 = vpop.permute.xlu0 %1252
    %s1255 = sor.u32 256, 8
    %1256 = vbcast.lane.b32.xlu0 %v1249, %s1255
    %v1257 = vpop.permute.xlu0 %1256
    %s1259 = sor.u32 256, 16
    %1260 = vbcast.lane.b32.xlu0 %v1249, %s1259
    %v1261 = vpop.permute.xlu0 %1260
    %s1263 = sor.u32 256, 24
    %1264 = vbcast.lane.b32.xlu0 %v1249, %s1263
    %v1265 = vpop.permute.xlu0 %1264
    %v1270 = vadd.f32 %v1224, %v1253
    %v1271 = vadd.f32 %v1227, %v1257
    %v1272 = vadd.f32 %v1230, %v1261
    %v1273 = vadd.f32 %v1233, %v1265
    %v1274 = vadd.f32 %v1236, %v1253
    %v1275 = vadd.f32 %v1239, %v1257
    %v1276 = vadd.f32 %v1242, %v1261
    %v1277 = vadd.f32 %v1245, %v1265
    %v1278 = vxor.u32 %v1270, 2147483648
    %v1279 = vxor.u32 %v1271, 2147483648
    %v1280 = vxor.u32 %v1272, 2147483648
    %v1281 = vxor.u32 %v1273, 2147483648
    %v1282 = vxor.u32 %v1274, 2147483648
    %v1283 = vxor.u32 %v1275, 2147483648
    %v1284 = vxor.u32 %v1276, 2147483648
    %v1285 = vxor.u32 %v1277, 2147483648
    %v1286 = vmul.f32 %v1278, 1.442695
    %v1287 = vpow.pop %v1286
    %v1288 = vmul.f32 %v1279, 1.442695
    %v1289 = vpow.pop %v1288
    %v1290 = vmul.f32 %v1280, 1.442695
    %v1291 = vpow.pop %v1290
    %v1292 = vmul.f32 %v1281, 1.442695
    %v1293 = vpow.pop %v1292
    %v1294 = vmul.f32 %v1282, 1.442695
    %v1295 = vpow.pop %v1294
    %v1296 = vmul.f32 %v1283, 1.442695
    %v1297 = vpow.pop %v1296
    %v1298 = vmul.f32 %v1284, 1.442695
    %v1299 = vpow.pop %v1298
    %v1300 = vmul.f32 %v1285, 1.442695
    %v1301 = vpow.pop %v1300
    %v1302 = vadd.f32 %v1287, 1.0
    %v1303 = vadd.f32 %v1289, 1.0
    %v1304 = vadd.f32 %v1291, 1.0
    %v1305 = vadd.f32 %v1293, 1.0
    %v1306 = vadd.f32 %v1295, 1.0
    %v1307 = vadd.f32 %v1297, 1.0
    %v1308 = vadd.f32 %v1299, 1.0
    %v1309 = vadd.f32 %v1301, 1.0
    %v1310 = vrcp.pop %v1302
    %v1311 = vmul.f32 1.0, %v1310
    %v1312 = vrcp.pop %v1303
    %v1313 = vmul.f32 1.0, %v1312
    %v1314 = vrcp.pop %v1304
    %v1315 = vmul.f32 1.0, %v1314
    %v1316 = vrcp.pop %v1305
    %v1317 = vmul.f32 1.0, %v1316
    %v1318 = vrcp.pop %v1306
    %v1319 = vmul.f32 1.0, %v1318
    %v1320 = vrcp.pop %v1307
    %v1321 = vmul.f32 1.0, %v1320
    %v1322 = vrcp.pop %v1308
    %v1323 = vmul.f32 1.0, %v1322
    %v1324 = vrcp.pop %v1309
    %v1325 = vmul.f32 1.0, %v1324
    %1327 = vset.pattern.permute.xlu0 0
    %1328 = vperm.xlu0 %1327, %v1311
    %v1329 = vpop.permute.xlu0 %1328
    %1332 = vset.pattern.permute.xlu0 0
    %1333 = vperm.xlu0 %1332, %v1313
    %v1334 = vpop.permute.xlu0 %1333
    %1337 = vset.pattern.permute.xlu0 0
    %1338 = vperm.xlu0 %1337, %v1315
    %v1339 = vpop.permute.xlu0 %1338
    %1342 = vset.pattern.permute.xlu0 0
    %1343 = vperm.xlu0 %1342, %v1317
    %v1344 = vpop.permute.xlu0 %1343
    %1347 = vset.pattern.permute.xlu0 0
    %1348 = vperm.xlu0 %1347, %v1319
    %v1349 = vpop.permute.xlu0 %1348
    %1352 = vset.pattern.permute.xlu0 0
    %1353 = vperm.xlu0 %1352, %v1321
    %v1354 = vpop.permute.xlu0 %1353
    %1357 = vset.pattern.permute.xlu0 0
    %1358 = vperm.xlu0 %1357, %v1323
    %v1359 = vpop.permute.xlu0 %1358
    %1362 = vset.pattern.permute.xlu0 0
    %1363 = vperm.xlu0 %1362, %v1325
    %v1364 = vpop.permute.xlu0 %1363
    %v1366 = vmul.f32 %v26, %v1329
    %v1367 = vmul.f32 %v27, %v1329
    %v1368 = vmul.f32 %v28, %v1334
    %v1369 = vmul.f32 %v29, %v1334
    %v1370 = vmul.f32 %v30, %v1339
    %v1371 = vmul.f32 %v31, %v1339
    %v1372 = vmul.f32 %v32, %v1344
    %v1373 = vmul.f32 %v33, %v1344
    %v1374 = vmul.f32 %v34, %v1349
    %v1375 = vmul.f32 %v35, %v1349
    %v1376 = vmul.f32 %v36, %v1354
    %v1377 = vmul.f32 %v37, %v1354
    %v1378 = vmul.f32 %v38, %v1359
    %v1379 = vmul.f32 %v39, %v1359
    %v1380 = vmul.f32 %v40, %v1364
    %v1381 = vmul.f32 %v41, %v1364
    %1382 = vst [vmem:[#allocation5] sm:$0xff] %v1366
    %1383 = vst [vmem:[#allocation5 + $0x8] sm:$0xff] %v1367
    %1384 = vst [vmem:[#allocation5 + $0x10] sm:$0xff] %v1368
    %1385 = vst [vmem:[#allocation5 + $0x18] sm:$0xff] %v1369
    %1386 = vst [vmem:[#allocation5 + $0x20] sm:$0xff] %v1370
    %1387 = vst [vmem:[#allocation5 + $0x28] sm:$0xff] %v1371
    %1388 = vst [vmem:[#allocation5 + $0x30] sm:$0xff] %v1372
    %1389 = vst [vmem:[#allocation5 + $0x38] sm:$0xff] %v1373
    %1390 = vst [vmem:[#allocation5 + $0x40] sm:$0xff] %v1374
    %1391 = vst [vmem:[#allocation5 + $0x48] sm:$0xff] %v1375
    %1392 = vst [vmem:[#allocation5 + $0x50] sm:$0xff] %v1376
    %1393 = vst [vmem:[#allocation5 + $0x58] sm:$0xff] %v1377
    %1394 = vst [vmem:[#allocation5 + $0x60] sm:$0xff] %v1378
    %1395 = vst [vmem:[#allocation5 + $0x68] sm:$0xff] %v1379
    %1396 = vst [vmem:[#allocation5 + $0x70] sm:$0xff] %v1380
    %1397 = vst [vmem:[#allocation5 + $0x78] sm:$0xff] %v1381
    // Predicated region
    $region14: #{tpu_custom_call.1} parent=1 // pred_check
      _
    $region15: #{tpu_custom_call.1} parent=1 // pred_check_branch
      %1399 = sbr.rel (0) target = $region17
    $region16: #{tpu_custom_call.1} parent=1 // pred_region
      %s1401 = ssub.s32 2048, 2048
      %1402 = vsyncadd [#allocation4], %s1401
      %s1403 = sshll.u32 [#allocation5], 4
      %s1404 = int_to_ptr.vmem [resolvable:$true] %s1403
      %1409 = dma.vmem_to_hbm [thread:$0]  %s1404, 2048, %s2, [#allocation4], 256, 256, 16
    $region17: #{tpu_custom_call.1} parent=1 // pred_fallthru
      _
    // Predicated region
    $region18: #{tpu_custom_call.1} parent=1 // pred_check
      _
    $region19: #{tpu_custom_call.1} parent=1 // pred_check_branch
      %1411 = sbr.rel (0) target = $region21
    $region20: #{tpu_custom_call.1} parent=1 // pred_region
      %1412 = dma.done [#allocation4], 2048
    $region21: #{tpu_custom_call.1} parent=1 // pred_fallthru
      _
    %1413 = vsyncpa [#allocation3], 1
    %1414 = vsyncpa [#allocation4], 1

</llo_original>
